<compile_context>
chip_gen: v7x
topology: tpu7x:2x2x1
jax: 0.10.0
libtpu: 0.0.40
codegen_flags: <defaults>
</compile_context>

<pallas_src>
import functools

import jax
import jax.numpy as jnp
from jax import lax
from jax.experimental import pallas as pl
from jax.experimental.pallas import tpu as pltpu


def _round_up(x, m):
    return (x + m - 1) // m * m


def _rnn_kernel(ids_ref, p_ref, whh_ref, wfc_ref, bfc_ref, out_ref, *, seq_len, batch_p):
    """Single-invocation RNN forward.

    ids_ref : (T*Bp, 1) int32  time-major flattened token ids (row = t*Bp + b),
              padded batch rows carry token 0 (independent, discarded outside).
    p_ref   : (Vc, H)  f32     P = emb @ W_ih^T + b_ih + b_hh, rows zero-padded to Vc.
    whh_ref : (H, H)   mm_dtype = W_hh^T
    wfc_ref : (H, Vp)  mm_dtype = W_fc^T, vocab padded to a full 128-lane tile
    bfc_ref : (1, Vp)  f32
    out_ref : (T*Bp, Vp) f32 logits (lane-dense)
    """
    n_rows = seq_len * batch_p
    vc = p_ref.shape[0]
    h_dim = whh_ref.shape[0]

    # (1) Recover the (folded) input projection for every timestep with one tiny
    #     one-hot MXU matmul: exact row selection out of the precomputed P table.
    ids = ids_ref[...]                                              # (n_rows, 1)
    cols = lax.broadcasted_iota(jnp.int32, (n_rows, vc), 1)
    onehot = (cols == ids).astype(p_ref.dtype)                      # (n_rows, Vc)
    xp = jnp.dot(onehot, p_ref[...], preferred_element_type=jnp.float32)  # (n_rows, H) f32

    whh = whh_ref[...]
    mm_dtype = whh.dtype

    # (2) Serial recurrence; h carried in registers in f32 (only the matmul
    #     operand is cast), h_t history collected in registers for the fc matmul.
    h = jnp.zeros((batch_p, h_dim), jnp.float32)
    hs = []
    for t in range(seq_len):                       # static full unroll (T is small)
        pre = xp[t * batch_p:(t + 1) * batch_p, :] + jnp.dot(
            h.astype(mm_dtype), whh, preferred_element_type=jnp.float32)
        h = jnp.tanh(pre)                          # f32 tanh / accumulation
        hs.append(h)

    h_all = jnp.concatenate(hs, axis=0).astype(wfc_ref.dtype)       # (n_rows, H)

    # (3) fc projection: one batched, lane-dense matmul over all T*Bp hidden states.
    out_ref[...] = (
        jnp.dot(h_all, wfc_ref[...], preferred_element_type=jnp.float32)
        + bfc_ref[...]
    )


def prepare_params(emb, w_ih, w_hh, b_ih, b_hh, w_fc, b_fc, matmul_dtype=jnp.bfloat16):
    """One-time weight preparation (run once per model, cached across calls)."""
    V, _E = emb.shape
    H = w_hh.shape[0]
    Vc = _round_up(V, 128)            # padded contraction dim for the one-hot gather
    Vp = _round_up(V, 128)            # padded lane-dense output vocab

    # Fold embedding, input projection and both RNN biases: P[v] = emb[v] @ W_ih^T + b_ih + b_hh
    p = (emb.astype(jnp.float32) @ w_ih.T.astype(jnp.float32)
         + (b_ih + b_hh).astype(jnp.float32))                       # (V, H) f32
    p_pad = jnp.zeros((Vc, H), jnp.float32).at[:V, :].set(p)

    whh_t = w_hh.T.astype(matmul_dtype)                             # (H, H)
    wfc_t = jnp.zeros((H, Vp), matmul_dtype).at[:, :V].set(w_fc.T.astype(matmul_dtype))
    bfc_p = jnp.zeros((1, Vp), jnp.float32).at[:, :V].set(
        b_fc.reshape(1, V).astype(jnp.float32))

    arrays = (p_pad, whh_t, wfc_t, bfc_p)
    statics = dict(vocab=V, hidden=H, vc=Vc, vp=Vp)
    return arrays, statics


def make_basic_rnn_forward(params, matmul_dtype=jnp.bfloat16):
    """Returns a jitted forward(input_ids) -> (B, T, V) logits.

    Matches Embedding -> nn.RNN(batch_first=True, tanh, h0=0) -> Linear.
    matmul_dtype=jnp.bfloat16 (default) feeds the MXU bf16 operands with f32
    accumulation and an f32-carried hidden state; jnp.float32 is semantics-faithful.
    """
    (p_pad, whh_t, wfc_t, bfc_p), statics = prepare_params(*params, matmul_dtype=matmul_dtype)
    V, Vp = statics["vocab"], statics["vp"]

    @jax.jit
    def forward(input_ids):
        B, T = input_ids.shape
        Bp = _round_up(max(B, 8), 8)      # pad batch to a full sublane tile

        # Only per-call prep left: pad / time-major-flatten the (tiny) int ids.
        ids_tm = jnp.zeros((T, Bp), jnp.int32).at[:, :B].set(
            input_ids.T.astype(jnp.int32))
        ids_col = ids_tm.reshape(T * Bp, 1)

        kernel = functools.partial(_rnn_kernel, seq_len=T, batch_p=Bp)

        out_flat = pl.pallas_call(
            kernel,
            out_shape=jax.ShapeDtypeStruct((T * Bp, Vp), jnp.float32),
            grid_spec=pltpu.PrefetchScalarGridSpec(
                num_scalar_prefetch=0,
                grid=(1,),                                         # single invocation
                in_specs=[
                    pl.BlockSpec((T * Bp, 1), lambda i: (0, 0)),   # token ids (time-major)
                    pl.BlockSpec(p_pad.shape, lambda i: (0, 0)),   # P = emb@W_ih^T + biases
                    pl.BlockSpec(whh_t.shape, lambda i: (0, 0)),   # W_hh^T
                    pl.BlockSpec(wfc_t.shape, lambda i: (0, 0)),   # W_fc^T (V padded)
                    pl.BlockSpec(bfc_p.shape, lambda i: (0, 0)),   # b_fc  (V padded)
                ],
                out_specs=pl.BlockSpec((T * Bp, Vp), lambda i: (0, 0)),
            ),
            compiler_params=pltpu.CompilerParams(
                dimension_semantics=("arbitrary",)),
        )(ids_col, p_pad, whh_t, wfc_t, bfc_p)

        logits = out_flat.reshape(T, Bp, Vp)[:, :B, :V]            # drop padding
        return jnp.transpose(logits, (1, 0, 2))                    # (B, T, V)

    return forward


def init_params(key, vocab_size, embedding_dim, hidden_dim):
    ks = jax.random.split(key, 7)
    k = 1.0 / jnp.sqrt(hidden_dim)
    emb = jax.random.normal(ks[0], (vocab_size, embedding_dim), jnp.float32)
    w_ih = jax.random.uniform(ks[1], (hidden_dim, embedding_dim), jnp.float32, -k, k)
    w_hh = jax.random.uniform(ks[2], (hidden_dim, hidden_dim), jnp.float32, -k, k)
    b_ih = jax.random.uniform(ks[3], (hidden_dim,), jnp.float32, -k, k)
    b_hh = jax.random.uniform(ks[4], (hidden_dim,), jnp.float32, -k, k)
    w_fc = jax.random.uniform(ks[5], (vocab_size, hidden_dim), jnp.float32, -k, k)
    b_fc = jax.random.uniform(ks[6], (vocab_size,), jnp.float32, -k, k)
    return emb, w_ih, w_hh, b_ih, b_hh, w_fc, b_fc


if __name__ == "__main__":
    vocab_size, embedding_dim, hidden_dim = 32, 64, 128
    B, T = 2, 8

    key = jax.random.PRNGKey(0)
    pkey, ikey = jax.random.split(key)
    params = init_params(pkey, vocab_size, embedding_dim, hidden_dim)
    input_ids = jax.random.randint(ikey, (B, T), 0, vocab_size, dtype=jnp.int32)

    # Pure-JAX reference (nn.RNN tanh recurrence, h0 = 0, then Linear).
    emb, w_ih, w_hh, b_ih, b_hh, w_fc, b_fc = params
    x = emb[input_ids]

    def step(h, x_t):
        h = jnp.tanh(x_t @ w_ih.T + b_ih + h @ w_hh.T + b_hh)
        return h, h

    _, hs = lax.scan(step, jnp.zeros((B, hidden_dim), jnp.float32),
                     jnp.transpose(x, (1, 0, 2)))
    ref = jnp.transpose(hs, (1, 0, 2)) @ w_fc.T + b_fc

    # f32-operand path: semantics-faithful to the PyTorch module.
    fwd_f32 = make_basic_rnn_forward(params, matmul_dtype=jnp.float32)
    logits_f32 = jax.block_until_ready(fwd_f32(input_ids))
    assert logits_f32.shape == (B, T, vocab_size)
    assert jnp.allclose(logits_f32, ref, atol=1e-3, rtol=1e-3)

    # bf16-operand production path (f32 accumulation, f32-carried hidden state).
    fwd_bf16 = make_basic_rnn_forward(params)      # default: bfloat16 MXU operands
    logits_bf16 = jax.block_until_ready(fwd_bf16(input_ids))
    assert logits_bf16.shape == (B, T, vocab_size)
    assert jnp.allclose(logits_bf16, ref, atol=5e-2, rtol=5e-2)

    print("KERNEL_OK")
</pallas_src>

<mosaic_0001>
module attributes {stable_mosaic.version = 11 : i64} {
  func.func @_rnn_kernel(%arg0: i32, %arg1: memref<64x1xi32, #tpu.memory_space<vmem>>, %arg2: memref<128x128xf32, #tpu.memory_space<vmem>>, %arg3: memref<128x128xf32, #tpu.memory_space<vmem>>, %arg4: memref<128x128xf32, #tpu.memory_space<vmem>>, %arg5: memref<1x128xf32, #tpu.memory_space<vmem>>, %arg6: memref<64x128xf32, #tpu.memory_space<vmem>>) attributes {dimension_semantics = [#tpu.dimension_semantics<arbitrary>], iteration_bounds = array<i64: 1>, scalar_prefetch = 0 : i64, scratch_operands = 0 : i64, tpu.core_type = #tpu.core_type<tc>, window_params = [{pipeline_mode = #tpu.pipeline_mode<synchronous>, transform_indices = @transform_0, window_bounds = array<i64: 64, 1>}, {pipeline_mode = #tpu.pipeline_mode<synchronous>, transform_indices = @transform_1, window_bounds = array<i64: 128, 128>}, {pipeline_mode = #tpu.pipeline_mode<synchronous>, transform_indices = @transform_2, window_bounds = array<i64: 128, 128>}, {pipeline_mode = #tpu.pipeline_mode<synchronous>, transform_indices = @transform_3, window_bounds = array<i64: 128, 128>}, {pipeline_mode = #tpu.pipeline_mode<synchronous>, transform_indices = @transform_4, window_bounds = array<i64: 1, 128>}, {pipeline_mode = #tpu.pipeline_mode<synchronous>, transform_indices = @transform_5, window_bounds = array<i64: 64, 128>}]} {
    %c0 = arith.constant 0 : index
    %c0_0 = arith.constant 0 : index
    %0 = vector.load %arg1[%c0, %c0_0] : memref<64x1xi32, #tpu.memory_space<vmem>>, vector<64x1xi32>
    %1 = tpu.iota {dimensions = array<i32: 1>} : vector<64x128xi32>
    %2 = vector.broadcast %0 : vector<64x1xi32> to vector<64x128xi32>
    %3 = arith.cmpi eq, %1, %2 : vector<64x128xi32>
    %4 = arith.extui %3 : vector<64x128xi1> to vector<64x128xi32>
    %5 = arith.sitofp %4 : vector<64x128xi32> to vector<64x128xf32>
    %c0_1 = arith.constant 0 : index
    %c0_2 = arith.constant 0 : index
    %6 = vector.load %arg2[%c0_1, %c0_2] : memref<128x128xf32, #tpu.memory_space<vmem>>, vector<128x128xf32>
    %cst = arith.constant dense<0.000000e+00> : vector<64x128xf32>
    %7 = tpu.matmul %5, %6, %cst {dimension_numbers = #tpu.dot_dimension_numbers<[1], [0], [0], [1], [0, 0, 1, 1], [], []>} : vector<64x128xf32>, vector<128x128xf32>, vector<64x128xf32> -> vector<64x128xf32>
    %c0_3 = arith.constant 0 : index
    %c0_4 = arith.constant 0 : index
    %8 = vector.load %arg3[%c0_3, %c0_4] : memref<128x128xf32, #tpu.memory_space<vmem>>, vector<128x128xf32>
    %cst_5 = arith.constant 0.000000e+00 : f32
    %9 = vector.broadcast %cst_5 : f32 to vector<8x128xf32>
    %10 = vector.extract_strided_slice %7 {offsets = [0, 0], sizes = [8, 128], strides = [1, 1]} : vector<64x128xf32> to vector<8x128xf32>
    %cst_6 = arith.constant dense<0.000000e+00> : vector<8x128xf32>
    %11 = tpu.matmul %9, %8, %cst_6 {dimension_numbers = #tpu.dot_dimension_numbers<[1], [0], [0], [1], [0, 0, 1, 1], [], []>} : vector<8x128xf32>, vector<128x128xf32>, vector<8x128xf32> -> vector<8x128xf32>
    %12 = arith.addf %10, %11 : vector<8x128xf32>
    %13 = math.tanh %12 : vector<8x128xf32>
    %14 = vector.extract_strided_slice %7 {offsets = [8, 0], sizes = [8, 128], strides = [1, 1]} : vector<64x128xf32> to vector<8x128xf32>
    %cst_7 = arith.constant dense<0.000000e+00> : vector<8x128xf32>
    %15 = tpu.matmul %13, %8, %cst_7 {dimension_numbers = #tpu.dot_dimension_numbers<[1], [0], [0], [1], [0, 0, 1, 1], [], []>} : vector<8x128xf32>, vector<128x128xf32>, vector<8x128xf32> -> vector<8x128xf32>
    %16 = arith.addf %14, %15 : vector<8x128xf32>
    %17 = math.tanh %16 : vector<8x128xf32>
    %18 = vector.extract_strided_slice %7 {offsets = [16, 0], sizes = [8, 128], strides = [1, 1]} : vector<64x128xf32> to vector<8x128xf32>
    %cst_8 = arith.constant dense<0.000000e+00> : vector<8x128xf32>
    %19 = tpu.matmul %17, %8, %cst_8 {dimension_numbers = #tpu.dot_dimension_numbers<[1], [0], [0], [1], [0, 0, 1, 1], [], []>} : vector<8x128xf32>, vector<128x128xf32>, vector<8x128xf32> -> vector<8x128xf32>
    %20 = arith.addf %18, %19 : vector<8x128xf32>
    %21 = math.tanh %20 : vector<8x128xf32>
    %22 = vector.extract_strided_slice %7 {offsets = [24, 0], sizes = [8, 128], strides = [1, 1]} : vector<64x128xf32> to vector<8x128xf32>
    %cst_9 = arith.constant dense<0.000000e+00> : vector<8x128xf32>
    %23 = tpu.matmul %21, %8, %cst_9 {dimension_numbers = #tpu.dot_dimension_numbers<[1], [0], [0], [1], [0, 0, 1, 1], [], []>} : vector<8x128xf32>, vector<128x128xf32>, vector<8x128xf32> -> vector<8x128xf32>
    %24 = arith.addf %22, %23 : vector<8x128xf32>
    %25 = math.tanh %24 : vector<8x128xf32>
    %26 = vector.extract_strided_slice %7 {offsets = [32, 0], sizes = [8, 128], strides = [1, 1]} : vector<64x128xf32> to vector<8x128xf32>
    %cst_10 = arith.constant dense<0.000000e+00> : vector<8x128xf32>
    %27 = tpu.matmul %25, %8, %cst_10 {dimension_numbers = #tpu.dot_dimension_numbers<[1], [0], [0], [1], [0, 0, 1, 1], [], []>} : vector<8x128xf32>, vector<128x128xf32>, vector<8x128xf32> -> vector<8x128xf32>
    %28 = arith.addf %26, %27 : vector<8x128xf32>
    %29 = math.tanh %28 : vector<8x128xf32>
    %30 = vector.extract_strided_slice %7 {offsets = [40, 0], sizes = [8, 128], strides = [1, 1]} : vector<64x128xf32> to vector<8x128xf32>
    %cst_11 = arith.constant dense<0.000000e+00> : vector<8x128xf32>
    %31 = tpu.matmul %29, %8, %cst_11 {dimension_numbers = #tpu.dot_dimension_numbers<[1], [0], [0], [1], [0, 0, 1, 1], [], []>} : vector<8x128xf32>, vector<128x128xf32>, vector<8x128xf32> -> vector<8x128xf32>
    %32 = arith.addf %30, %31 : vector<8x128xf32>
    %33 = math.tanh %32 : vector<8x128xf32>
    %34 = vector.extract_strided_slice %7 {offsets = [48, 0], sizes = [8, 128], strides = [1, 1]} : vector<64x128xf32> to vector<8x128xf32>
    %cst_12 = arith.constant dense<0.000000e+00> : vector<8x128xf32>
    %35 = tpu.matmul %33, %8, %cst_12 {dimension_numbers = #tpu.dot_dimension_numbers<[1], [0], [0], [1], [0, 0, 1, 1], [], []>} : vector<8x128xf32>, vector<128x128xf32>, vector<8x128xf32> -> vector<8x128xf32>
    %36 = arith.addf %34, %35 : vector<8x128xf32>
    %37 = math.tanh %36 : vector<8x128xf32>
    %38 = vector.extract_strided_slice %7 {offsets = [56, 0], sizes = [8, 128], strides = [1, 1]} : vector<64x128xf32> to vector<8x128xf32>
    %cst_13 = arith.constant dense<0.000000e+00> : vector<8x128xf32>
    %39 = tpu.matmul %37, %8, %cst_13 {dimension_numbers = #tpu.dot_dimension_numbers<[1], [0], [0], [1], [0, 0, 1, 1], [], []>} : vector<8x128xf32>, vector<128x128xf32>, vector<8x128xf32> -> vector<8x128xf32>
    %40 = arith.addf %38, %39 : vector<8x128xf32>
    %41 = math.tanh %40 : vector<8x128xf32>
    %42 = tpu.concatenate %13, %17, %21, %25, %29, %33, %37, %41 in 0 : vector<8x128xf32>, vector<8x128xf32>, vector<8x128xf32>, vector<8x128xf32>, vector<8x128xf32>, vector<8x128xf32>, vector<8x128xf32>, vector<8x128xf32> -> vector<64x128xf32>
    %c0_14 = arith.constant 0 : index
    %c0_15 = arith.constant 0 : index
    %43 = vector.load %arg4[%c0_14, %c0_15] : memref<128x128xf32, #tpu.memory_space<vmem>>, vector<128x128xf32>
    %cst_16 = arith.constant dense<0.000000e+00> : vector<64x128xf32>
    %44 = tpu.matmul %42, %43, %cst_16 {dimension_numbers = #tpu.dot_dimension_numbers<[1], [0], [0], [1], [0, 0, 1, 1], [], []>} : vector<64x128xf32>, vector<128x128xf32>, vector<64x128xf32> -> vector<64x128xf32>
    %c0_17 = arith.constant 0 : index
    %c0_18 = arith.constant 0 : index
    %45 = vector.load %arg5[%c0_17, %c0_18] : memref<1x128xf32, #tpu.memory_space<vmem>>, vector<1x128xf32>
    %46 = vector.broadcast %45 : vector<1x128xf32> to vector<64x128xf32>
    %47 = arith.addf %44, %46 : vector<64x128xf32>
    %c0_19 = arith.constant 0 : index
    %c0_20 = arith.constant 0 : index
    %48 = vector.load %arg6[%c0_19, %c0_20] : memref<64x128xf32, #tpu.memory_space<vmem>>, vector<64x128xf32>
    tpu.vector_store %arg6[%c0_19, %c0_20], %47 {strides = array<i32>} : memref<64x128xf32, #tpu.memory_space<vmem>>, vector<64x128xf32>,
    return
  }
  func.func @transform_0(%arg0: i32) -> (i32, i32) {
    %c0_i32 = arith.constant 0 : i32
    %c0_i32_0 = arith.constant 0 : i32
    %c0_i32_1 = arith.constant 0 : i32
    return %c0_i32, %c0_i32_0 : i32, i32
  }
  func.func @transform_1(%arg0: i32) -> (i32, i32) {
    %c0_i32 = arith.constant 0 : i32
    %c0_i32_0 = arith.constant 0 : i32
    %c0_i32_1 = arith.constant 0 : i32
    return %c0_i32, %c0_i32_0 : i32, i32
  }
  func.func @transform_2(%arg0: i32) -> (i32, i32) {
    %c0_i32 = arith.constant 0 : i32
    %c0_i32_0 = arith.constant 0 : i32
    %c0_i32_1 = arith.constant 0 : i32
    return %c0_i32, %c0_i32_0 : i32, i32
  }
  func.func @transform_3(%arg0: i32) -> (i32, i32) {
    %c0_i32 = arith.constant 0 : i32
    %c0_i32_0 = arith.constant 0 : i32
    %c0_i32_1 = arith.constant 0 : i32
    return %c0_i32, %c0_i32_0 : i32, i32
  }
  func.func @transform_4(%arg0: i32) -> (i32, i32) {
    %c0_i32 = arith.constant 0 : i32
    %c0_i32_0 = arith.constant 0 : i32
    %c0_i32_1 = arith.constant 0 : i32
    return %c0_i32, %c0_i32_0 : i32, i32
  }
  func.func @transform_5(%arg0: i32) -> (i32, i32) {
    %c0_i32 = arith.constant 0 : i32
    %c0_i32_0 = arith.constant 0 : i32
    %c0_i32_1 = arith.constant 0 : i32
    return %c0_i32, %c0_i32_0 : i32, i32
  }
}

</mosaic_0001>

<llo_original>
// kernel: forward.1
$region0: #{forward.1}
  #allocation0 [shape = 'u32[]', space=smem, size = 0x4, offset = 0x4, fixed_abs, tag = 'smem constant byte address 0x4 - core index']
  #allocation1 [shape = 'u32[144,128]{1,0:T(1,128)}', space=vmem, size = 0x12000, scoped, tag = 'internal scratch']
  %s0 = inlined_call_operand.vmem [shape: s32[64,1], index: 0, kind: input, shape index: {}]
  %s1 = inlined_call_operand.hbm [shape: f32[128,128], index: 1, kind: input, shape index: {}]
  %s2 = inlined_call_operand.hbm [shape: f32[128,128], index: 2, kind: input, shape index: {}]
  %s3 = inlined_call_operand.hbm [shape: f32[128,128], index: 3, kind: input, shape index: {}]
  %s4 = inlined_call_operand.vmem [shape: f32[1,128], index: 4, kind: input, shape index: {}]
  %s5 = inlined_call_operand.vmem [shape: f32[64,128], index: 5, kind: output, shape index: {}]
  %s6 = sld [smem:[#allocation0]]
  $region42: #{forward.1} parent=0
    _
  %s8 = ssub.s32 1, %s6
  %s9 = scalar_select 0, %s8, %s6
  $region1: #{forward.1} parent=0
    #allocation2 [shape = 'u8[65536]{0}', space=vmem, size = 0x10000, scoped, tag = 'input window, operand 1, single buffered']
    #allocation3 [shape = 's32[1]{0}', space=sflag, size = 0x4, scoped, tag = 'scoped memory for forward.1']
    #allocation4 [shape = 'u8[65536]{0}', space=vmem, size = 0x10000, scoped, tag = 'input window, operand 2, single buffered']
    #allocation5 [shape = 's32[1]{0}', space=sflag, size = 0x4, scoped, tag = 'scoped memory for forward.1']
    #allocation6 [shape = 'u8[65536]{0}', space=vmem, size = 0x10000, scoped, tag = 'input window, operand 3, single buffered']
    %10 = vsyncpa [#allocation3], 0
    %11 = vsyncpa [#allocation5], 0
    // Predicated region
    $region2: #{forward.1} parent=1 // pred_check
      _
    $region3: #{forward.1} parent=1 // pred_check_branch
      %13 = sbr.rel (0) target = $region5
    $region4: #{forward.1} parent=1 // pred_region
      _
    $region5: #{forward.1} parent=1 // pred_fallthru
      _
    // Predicated region
    $region6: #{forward.1} parent=1 // pred_check
      _
    $region7: #{forward.1} parent=1 // pred_check_branch
      %15 = sbr.rel (0) target = $region9
    $region8: #{forward.1} parent=1 // pred_region
      %s17 = ssub.s32 2048, 2048
      %18 = vsyncadd [#allocation3], %s17
      %s19 = sshll.u32 [#allocation2], 4
      %s20 = int_to_ptr.vmem [resolvable:$true] %s19
      %25 = dma.hbm_to_vmem [thread:$0]  %s1, 2048, %s20, [#allocation3], 128, 128, 8
    $region9: #{forward.1} parent=1 // pred_fallthru
      _
    // Predicated region
    $region10: #{forward.1} parent=1 // pred_check
      _
    $region11: #{forward.1} parent=1 // pred_check_branch
      %27 = sbr.rel (0) target = $region13
    $region12: #{forward.1} parent=1 // pred_region
      %s29 = ssub.s32 2048, 2048
      %30 = vsyncadd [#allocation5], %s29
      %s31 = sshll.u32 [#allocation4], 4
      %s32 = int_to_ptr.vmem [resolvable:$true] %s31
      %37 = dma.hbm_to_vmem [thread:$0]  %s2, 2048, %s32, [#allocation5], 128, 128, 8
    $region13: #{forward.1} parent=1 // pred_fallthru
      _
    // Predicated region
    $region14: #{forward.1} parent=1 // pred_check
      _
    $region15: #{forward.1} parent=1 // pred_check_branch
      %39 = sbr.rel (0) target = $region17
    $region16: #{forward.1} parent=1 // pred_region
      %s41 = ssub.s32 2048, 2048
      %42 = vsyncadd [#allocation5], %s41
      %s43 = sshll.u32 [#allocation6], 4
      %s44 = int_to_ptr.vmem [resolvable:$true] %s43
      %49 = dma.hbm_to_vmem [thread:$0]  %s3, 2048, %s44, [#allocation5], 128, 128, 8
    $region17: #{forward.1} parent=1 // pred_fallthru
      _
    // Predicated region
    $region18: #{forward.1} parent=1 // pred_check
      _
    $region19: #{forward.1} parent=1 // pred_check_branch
      %51 = sbr.rel (0) target = $region21
    $region20: #{forward.1} parent=1 // pred_region
      _
    $region21: #{forward.1} parent=1 // pred_fallthru
      _
    // Predicated region
    $region22: #{forward.1} parent=1 // pred_check
      _
    $region23: #{forward.1} parent=1 // pred_check_branch
      %53 = sbr.rel (0) target = $region25
    $region24: #{forward.1} parent=1 // pred_region
      %54 = dma.done [#allocation3], 2048
    $region25: #{forward.1} parent=1 // pred_fallthru
      _
    // Predicated region
    $region26: #{forward.1} parent=1 // pred_check
      _
    $region27: #{forward.1} parent=1 // pred_check_branch
      %56 = sbr.rel (0) target = $region29
    $region28: #{forward.1} parent=1 // pred_region
      %57 = dma.done [#allocation5], 2048
    $region29: #{forward.1} parent=1 // pred_fallthru
      _
    // Predicated region
    $region30: #{forward.1} parent=1 // pred_check
      _
    $region31: #{forward.1} parent=1 // pred_check_branch
      %59 = sbr.rel (0) target = $region33
    $region32: #{forward.1} parent=1 // pred_region
      %60 = dma.done [#allocation5], 2048
    $region33: #{forward.1} parent=1 // pred_fallthru
      _
    %v61 = vld [vmem:[%s0] sm:$0xff]
    %v62 = vld [vmem:[%s0 + $0x8] sm:$0xff]
    %v63 = vld [vmem:[%s0 + $0x10] sm:$0xff]
    %v64 = vld [vmem:[%s0 + $0x18] sm:$0xff]
    %v65 = vld [vmem:[%s0 + $0x20] sm:$0xff]
    %v66 = vld [vmem:[%s0 + $0x28] sm:$0xff]
    %v67 = vld [vmem:[%s0 + $0x30] sm:$0xff]
    %v68 = vld [vmem:[%s0 + $0x38] sm:$0xff]
    %v69 = vlaneseq
    %v70 = vand.u32 %v69, 127
    %71 = vset.pattern.permute.xlu0 0
    %72 = vperm.xlu0 %71, %v61
    %v73 = vpop.permute.xlu0 %72
    %74 = vset.pattern.permute.xlu0 0
    %75 = vperm.xlu0 %74, %v62
    %v76 = vpop.permute.xlu0 %75
    %77 = vset.pattern.permute.xlu0 0
    %78 = vperm.xlu0 %77, %v63
    %v79 = vpop.permute.xlu0 %78
    %80 = vset.pattern.permute.xlu0 0
    %81 = vperm.xlu0 %80, %v64
    %v82 = vpop.permute.xlu0 %81
    %83 = vset.pattern.permute.xlu0 0
    %84 = vperm.xlu0 %83, %v65
    %v85 = vpop.permute.xlu0 %84
    %86 = vset.pattern.permute.xlu0 0
    %87 = vperm.xlu0 %86, %v66
    %v88 = vpop.permute.xlu0 %87
    %89 = vset.pattern.permute.xlu0 0
    %90 = vperm.xlu0 %89, %v67
    %v91 = vpop.permute.xlu0 %90
    %92 = vset.pattern.permute.xlu0 0
    %93 = vperm.xlu0 %92, %v68
    %v94 = vpop.permute.xlu0 %93
    %vm95 = vcmp.eq.s32.totalorder %v70, %v73
    %vm96 = vcmp.eq.s32.totalorder %v70, %v76
    %vm97 = vcmp.eq.s32.totalorder %v70, %v79
    %vm98 = vcmp.eq.s32.totalorder %v70, %v82
    %vm99 = vcmp.eq.s32.totalorder %v70, %v85
    %vm100 = vcmp.eq.s32.totalorder %v70, %v88
    %vm101 = vcmp.eq.s32.totalorder %v70, %v91
    %vm102 = vcmp.eq.s32.totalorder %v70, %v94
    %v103 = vsel %vm95, 1, 0
    %v104 = vsel %vm96, 1, 0
    %v105 = vsel %vm97, 1, 0
    %v106 = vsel %vm98, 1, 0
    %v107 = vsel %vm99, 1, 0
    %v108 = vsel %vm100, 1, 0
    %v109 = vsel %vm101, 1, 0
    %v110 = vsel %vm102, 1, 0
    %v111 = vcvt.s32.f32 %v103
    %v112 = vcvt.s32.f32 %v104
    %v113 = vcvt.s32.f32 %v105
    %v114 = vcvt.s32.f32 %v106
    %v115 = vcvt.s32.f32 %v107
    %v116 = vcvt.s32.f32 %v108
    %v117 = vcvt.s32.f32 %v109
    %v118 = vcvt.s32.f32 %v110
    %v119 = vld [vmem:[#allocation2] sm:$0xff]
    %v120 = vld [vmem:[#allocation2 + $0x8] sm:$0xff]
    %v121 = vld [vmem:[#allocation2 + $0x10] sm:$0xff]
    %v122 = vld [vmem:[#allocation2 + $0x18] sm:$0xff]
    %v123 = vld [vmem:[#allocation2 + $0x20] sm:$0xff]
    %v124 = vld [vmem:[#allocation2 + $0x28] sm:$0xff]
    %v125 = vld [vmem:[#allocation2 + $0x30] sm:$0xff]
    %v126 = vld [vmem:[#allocation2 + $0x38] sm:$0xff]
    %v127 = vld [vmem:[#allocation2 + $0x40] sm:$0xff]
    %v128 = vld [vmem:[#allocation2 + $0x48] sm:$0xff]
    %v129 = vld [vmem:[#allocation2 + $0x50] sm:$0xff]
    %v130 = vld [vmem:[#allocation2 + $0x58] sm:$0xff]
    %v131 = vld [vmem:[#allocation2 + $0x60] sm:$0xff]
    %v132 = vld [vmem:[#allocation2 + $0x68] sm:$0xff]
    %v133 = vld [vmem:[#allocation2 + $0x70] sm:$0xff]
    %v134 = vld [vmem:[#allocation2 + $0x78] sm:$0xff]
    %135 = vmatprep.subr.mxu0 0.0
    %136 = vmatpush1.msra.mxu0 %v119
    %137 = vmatprep.subr.mxu0 0.0
    %138 = vmatpush1.msra.mxu0 %v120
    %139 = vmatprep.subr.mxu0 0.0
    %140 = vmatpush1.msra.mxu0 %v121
    %141 = vmatprep.subr.mxu0 0.0
    %142 = vmatpush1.msra.mxu0 %v122
    %143 = vmatprep.subr.mxu0 0.0
    %144 = vmatpush1.msra.mxu0 %v123
    %145 = vmatprep.subr.mxu0 0.0
    %146 = vmatpush1.msra.mxu0 %v124
    %147 = vmatprep.subr.mxu0 0.0
    %148 = vmatpush1.msra.mxu0 %v125
    %149 = vmatprep.subr.mxu0 0.0
    %150 = vmatpush1.msra.mxu0 %v126
    %151 = vmatprep.subr.mxu0 0.0
    %152 = vmatpush1.msra.mxu0 %v127
    %153 = vmatprep.subr.mxu0 0.0
    %154 = vmatpush1.msra.mxu0 %v128
    %155 = vmatprep.subr.mxu0 0.0
    %156 = vmatpush1.msra.mxu0 %v129
    %157 = vmatprep.subr.mxu0 0.0
    %158 = vmatpush1.msra.mxu0 %v130
    %159 = vmatprep.subr.mxu0 0.0
    %160 = vmatpush1.msra.mxu0 %v131
    %161 = vmatprep.subr.mxu0 0.0
    %162 = vmatpush1.msra.mxu0 %v132
    %163 = vmatprep.subr.mxu0 0.0
    %164 = vmatpush1.msra.mxu0 %v133
    %165 = vmatprep.subr.mxu0 0.0
    %166 = vmatpush1.msra.mxu0 %v134
    %167 = vmatprep.subr.mxu0 0.0
    %168 = vmatpush1.msra.mxu0 0.0
    %169 = vmatprep.subr.mxu0 0.0
    %170 = vmatpush1.msra.mxu0 0.0
    %171 = vmatprep.subr.mxu0 0.0
    %172 = vmatpush1.msra.mxu0 0.0
    %173 = vmatprep.subr.mxu0 0.0
    %174 = vmatpush1.msra.mxu0 0.0
    %175 = vmatprep.subr.mxu0 0.0
    %176 = vmatpush1.msra.mxu0 0.0
    %177 = vmatprep.subr.mxu0 0.0
    %178 = vmatpush1.msra.mxu0 0.0
    %179 = vmatprep.subr.mxu0 0.0
    %180 = vmatpush1.msra.mxu0 0.0
    %181 = vmatprep.subr.mxu0 0.0
    %182 = vmatpush1.msra.mxu0 0.0
    %183 = vmatprep.subr.mxu0 0.0
    %184 = vmatpush1.msra.mxu0 0.0
    %185 = vmatprep.subr.mxu0 0.0
    %186 = vmatpush1.msra.mxu0 0.0
    %187 = vmatprep.subr.mxu0 0.0
    %188 = vmatpush1.msra.mxu0 0.0
    %189 = vmatprep.subr.mxu0 0.0
    %190 = vmatpush1.msra.mxu0 0.0
    %191 = vmatprep.subr.mxu0 0.0
    %192 = vmatpush1.msra.mxu0 0.0
    %193 = vmatprep.subr.mxu0 0.0
    %194 = vmatpush1.msra.mxu0 0.0
    %195 = vmatprep.subr.mxu0 0.0
    %196 = vmatpush1.msra.mxu0 0.0
    %197 = vmatprep.subr.mxu0 0.0
    %198 = vmatpush1.msra.mxu0 0.0
    %199 = vmatprep.mubr.f32.mxu0 0.0
    %200 = vmatmul.mubr.f32.gmra.mrb[0].mxu0 %v111
    %v201 = vpop.f32.mrb[0].mxu0
    %v202 = vadd.f32 0.0, %v201
    %v203 = vpop.f32.mrb[0].mxu0
    %204 = vmatprep.mubr.f32.mxu0 0.0
    %205 = vmatmul.mubr.f32.gmra.mrb[0].mxu0 %v112
    %v206 = vpop.f32.mrb[0].mxu0
    %v207 = vadd.f32 0.0, %v206
    %v208 = vpop.f32.mrb[0].mxu0
    %209 = vmatprep.mubr.f32.mxu0 0.0
    %210 = vmatmul.mubr.f32.gmra.mrb[0].mxu0 %v113
    %v211 = vpop.f32.mrb[0].mxu0
    %v212 = vadd.f32 0.0, %v211
    %v213 = vpop.f32.mrb[0].mxu0
    %214 = vmatprep.mubr.f32.mxu0 0.0
    %215 = vmatmul.mubr.f32.gmra.mrb[0].mxu0 %v114
    %v216 = vpop.f32.mrb[0].mxu0
    %v217 = vadd.f32 0.0, %v216
    %v218 = vpop.f32.mrb[0].mxu0
    %219 = vmatprep.mubr.f32.mxu0 0.0
    %220 = vmatmul.mubr.f32.gmra.mrb[0].mxu0 %v115
    %v221 = vpop.f32.mrb[0].mxu0
    %v222 = vadd.f32 0.0, %v221
    %v223 = vpop.f32.mrb[0].mxu0
    %224 = vmatprep.mubr.f32.mxu0 0.0
    %225 = vmatmul.mubr.f32.gmra.mrb[0].mxu0 %v116
    %v226 = vpop.f32.mrb[0].mxu0
    %v227 = vadd.f32 0.0, %v226
    %v228 = vpop.f32.mrb[0].mxu0
    %229 = vmatprep.mubr.f32.mxu0 0.0
    %230 = vmatmul.mubr.f32.gmra.mrb[0].mxu0 %v117
    %v231 = vpop.f32.mrb[0].mxu0
    %v232 = vadd.f32 0.0, %v231
    %v233 = vpop.f32.mrb[0].mxu0
    %234 = vmatprep.mubr.f32.mxu0 0.0
    %235 = vmatmul.mubr.f32.gmra.mrb[0].mxu0 %v118
    %v236 = vpop.f32.mrb[0].mxu0
    %v237 = vadd.f32 0.0, %v236
    %v238 = vpop.f32.mrb[0].mxu0
    %239 = vdwg.mxu0
    %v240 = vld [vmem:[#allocation4] sm:$0xff]
    %v241 = vld [vmem:[#allocation4 + $0x8] sm:$0xff]
    %v242 = vld [vmem:[#allocation4 + $0x10] sm:$0xff]
    %v243 = vld [vmem:[#allocation4 + $0x18] sm:$0xff]
    %v244 = vld [vmem:[#allocation4 + $0x20] sm:$0xff]
    %v245 = vld [vmem:[#allocation4 + $0x28] sm:$0xff]
    %v246 = vld [vmem:[#allocation4 + $0x30] sm:$0xff]
    %v247 = vld [vmem:[#allocation4 + $0x38] sm:$0xff]
    %v248 = vld [vmem:[#allocation4 + $0x40] sm:$0xff]
    %v249 = vld [vmem:[#allocation4 + $0x48] sm:$0xff]
    %v250 = vld [vmem:[#allocation4 + $0x50] sm:$0xff]
    %v251 = vld [vmem:[#allocation4 + $0x58] sm:$0xff]
    %v252 = vld [vmem:[#allocation4 + $0x60] sm:$0xff]
    %v253 = vld [vmem:[#allocation4 + $0x68] sm:$0xff]
    %v254 = vld [vmem:[#allocation4 + $0x70] sm:$0xff]
    %v255 = vld [vmem:[#allocation4 + $0x78] sm:$0xff]
    %256 = vmatprep.subr.mxu0 0.0
    %257 = vmatpush1.msra.mxu0 %v240
    %258 = vmatprep.subr.mxu0 0.0
    %259 = vmatpush1.msra.mxu0 %v241
    %260 = vmatprep.subr.mxu0 0.0
    %261 = vmatpush1.msra.mxu0 %v242
    %262 = vmatprep.subr.mxu0 0.0
    %263 = vmatpush1.msra.mxu0 %v243
    %264 = vmatprep.subr.mxu0 0.0
    %265 = vmatpush1.msra.mxu0 %v244
    %266 = vmatprep.subr.mxu0 0.0
    %267 = vmatpush1.msra.mxu0 %v245
    %268 = vmatprep.subr.mxu0 0.0
    %269 = vmatpush1.msra.mxu0 %v246
    %270 = vmatprep.subr.mxu0 0.0
    %271 = vmatpush1.msra.mxu0 %v247
    %272 = vmatprep.subr.mxu0 0.0
    %273 = vmatpush1.msra.mxu0 %v248
    %274 = vmatprep.subr.mxu0 0.0
    %275 = vmatpush1.msra.mxu0 %v249
    %276 = vmatprep.subr.mxu0 0.0
    %277 = vmatpush1.msra.mxu0 %v250
    %278 = vmatprep.subr.mxu0 0.0
    %279 = vmatpush1.msra.mxu0 %v251
    %280 = vmatprep.subr.mxu0 0.0
    %281 = vmatpush1.msra.mxu0 %v252
    %282 = vmatprep.subr.mxu0 0.0
    %283 = vmatpush1.msra.mxu0 %v253
    %284 = vmatprep.subr.mxu0 0.0
    %285 = vmatpush1.msra.mxu0 %v254
    %286 = vmatprep.subr.mxu0 0.0
    %287 = vmatpush1.msra.mxu0 %v255
    %288 = vmatprep.subr.mxu0 0.0
    %289 = vmatpush1.msra.mxu0 0.0
    %290 = vmatprep.subr.mxu0 0.0
    %291 = vmatpush1.msra.mxu0 0.0
    %292 = vmatprep.subr.mxu0 0.0
    %293 = vmatpush1.msra.mxu0 0.0
    %294 = vmatprep.subr.mxu0 0.0
    %295 = vmatpush1.msra.mxu0 0.0
    %296 = vmatprep.subr.mxu0 0.0
    %297 = vmatpush1.msra.mxu0 0.0
    %298 = vmatprep.subr.mxu0 0.0
    %299 = vmatpush1.msra.mxu0 0.0
    %300 = vmatprep.subr.mxu0 0.0
    %301 = vmatpush1.msra.mxu0 0.0
    %302 = vmatprep.subr.mxu0 0.0
    %303 = vmatpush1.msra.mxu0 0.0
    %304 = vmatprep.subr.mxu0 0.0
    %305 = vmatpush1.msra.mxu0 0.0
    %306 = vmatprep.subr.mxu0 0.0
    %307 = vmatpush1.msra.mxu0 0.0
    %308 = vmatprep.subr.mxu0 0.0
    %309 = vmatpush1.msra.mxu0 0.0
    %310 = vmatprep.subr.mxu0 0.0
    %311 = vmatpush1.msra.mxu0 0.0
    %312 = vmatprep.subr.mxu0 0.0
    %313 = vmatpush1.msra.mxu0 0.0
    %314 = vmatprep.subr.mxu0 0.0
    %315 = vmatpush1.msra.mxu0 0.0
    %316 = vmatprep.subr.mxu0 0.0
    %317 = vmatpush1.msra.mxu0 0.0
    %318 = vmatprep.subr.mxu0 0.0
    %319 = vmatpush1.msra.mxu0 0.0
    %320 = vmatprep.mubr.f32.mxu0 0.0
    %321 = vmatmul.mubr.f32.gmra.mrb[0].mxu0 0.0
    %v322 = vpop.f32.mrb[0].mxu0
    %v323 = vadd.f32 0.0, %v322
    %v324 = vpop.f32.mrb[0].mxu0
    %325 = vdwg.mxu0
    %v326 = vadd.f32 %v202, %v323
    %v327 = vtanh.pop %v326
    %328 = vmatprep.subr.mxu0 0.0
    %329 = vmatpush1.msra.mxu0 %v240
    %330 = vmatprep.subr.mxu0 0.0
    %331 = vmatpush1.msra.mxu0 %v241
    %332 = vmatprep.subr.mxu0 0.0
    %333 = vmatpush1.msra.mxu0 %v242
    %334 = vmatprep.subr.mxu0 0.0
    %335 = vmatpush1.msra.mxu0 %v243
    %336 = vmatprep.subr.mxu0 0.0
    %337 = vmatpush1.msra.mxu0 %v244
    %338 = vmatprep.subr.mxu0 0.0
    %339 = vmatpush1.msra.mxu0 %v245
    %340 = vmatprep.subr.mxu0 0.0
    %341 = vmatpush1.msra.mxu0 %v246
    %342 = vmatprep.subr.mxu0 0.0
    %343 = vmatpush1.msra.mxu0 %v247
    %344 = vmatprep.subr.mxu0 0.0
    %345 = vmatpush1.msra.mxu0 %v248
    %346 = vmatprep.subr.mxu0 0.0
    %347 = vmatpush1.msra.mxu0 %v249
    %348 = vmatprep.subr.mxu0 0.0
    %349 = vmatpush1.msra.mxu0 %v250
    %350 = vmatprep.subr.mxu0 0.0
    %351 = vmatpush1.msra.mxu0 %v251
    %352 = vmatprep.subr.mxu0 0.0
    %353 = vmatpush1.msra.mxu0 %v252
    %354 = vmatprep.subr.mxu0 0.0
    %355 = vmatpush1.msra.mxu0 %v253
    %356 = vmatprep.subr.mxu0 0.0
    %357 = vmatpush1.msra.mxu0 %v254
    %358 = vmatprep.subr.mxu0 0.0
    %359 = vmatpush1.msra.mxu0 %v255
    %360 = vmatprep.subr.mxu0 0.0
    %361 = vmatpush1.msra.mxu0 0.0
    %362 = vmatprep.subr.mxu0 0.0
    %363 = vmatpush1.msra.mxu0 0.0
    %364 = vmatprep.subr.mxu0 0.0
    %365 = vmatpush1.msra.mxu0 0.0
    %366 = vmatprep.subr.mxu0 0.0
    %367 = vmatpush1.msra.mxu0 0.0
    %368 = vmatprep.subr.mxu0 0.0
    %369 = vmatpush1.msra.mxu0 0.0
    %370 = vmatprep.subr.mxu0 0.0
    %371 = vmatpush1.msra.mxu0 0.0
    %372 = vmatprep.subr.mxu0 0.0
    %373 = vmatpush1.msra.mxu0 0.0
    %374 = vmatprep.subr.mxu0 0.0
    %375 = vmatpush1.msra.mxu0 0.0
    %376 = vmatprep.subr.mxu0 0.0
    %377 = vmatpush1.msra.mxu0 0.0
    %378 = vmatprep.subr.mxu0 0.0
    %379 = vmatpush1.msra.mxu0 0.0
    %380 = vmatprep.subr.mxu0 0.0
    %381 = vmatpush1.msra.mxu0 0.0
    %382 = vmatprep.subr.mxu0 0.0
    %383 = vmatpush1.msra.mxu0 0.0
    %384 = vmatprep.subr.mxu0 0.0
    %385 = vmatpush1.msra.mxu0 0.0
    %386 = vmatprep.subr.mxu0 0.0
    %387 = vmatpush1.msra.mxu0 0.0
    %388 = vmatprep.subr.mxu0 0.0
    %389 = vmatpush1.msra.mxu0 0.0
    %390 = vmatprep.subr.mxu0 0.0
    %391 = vmatpush1.msra.mxu0 0.0
    %392 = vmatprep.mubr.f32.mxu0 0.0
    %393 = vmatmul.mubr.f32.gmra.mrb[0].mxu0 %v327
    %v394 = vpop.f32.mrb[0].mxu0
    %v395 = vadd.f32 0.0, %v394
    %v396 = vpop.f32.mrb[0].mxu0
    %397 = vdwg.mxu0
    %v398 = vadd.f32 %v207, %v395
    %v399 = vtanh.pop %v398
    %400 = vmatprep.subr.mxu0 0.0
    %401 = vmatpush1.msra.mxu0 %v240
    %402 = vmatprep.subr.mxu0 0.0
    %403 = vmatpush1.msra.mxu0 %v241
    %404 = vmatprep.subr.mxu0 0.0
    %405 = vmatpush1.msra.mxu0 %v242
    %406 = vmatprep.subr.mxu0 0.0
    %407 = vmatpush1.msra.mxu0 %v243
    %408 = vmatprep.subr.mxu0 0.0
    %409 = vmatpush1.msra.mxu0 %v244
    %410 = vmatprep.subr.mxu0 0.0
    %411 = vmatpush1.msra.mxu0 %v245
    %412 = vmatprep.subr.mxu0 0.0
    %413 = vmatpush1.msra.mxu0 %v246
    %414 = vmatprep.subr.mxu0 0.0
    %415 = vmatpush1.msra.mxu0 %v247
    %416 = vmatprep.subr.mxu0 0.0
    %417 = vmatpush1.msra.mxu0 %v248
    %418 = vmatprep.subr.mxu0 0.0
    %419 = vmatpush1.msra.mxu0 %v249
    %420 = vmatprep.subr.mxu0 0.0
    %421 = vmatpush1.msra.mxu0 %v250
    %422 = vmatprep.subr.mxu0 0.0
    %423 = vmatpush1.msra.mxu0 %v251
    %424 = vmatprep.subr.mxu0 0.0
    %425 = vmatpush1.msra.mxu0 %v252
    %426 = vmatprep.subr.mxu0 0.0
    %427 = vmatpush1.msra.mxu0 %v253
    %428 = vmatprep.subr.mxu0 0.0
    %429 = vmatpush1.msra.mxu0 %v254
    %430 = vmatprep.subr.mxu0 0.0
    %431 = vmatpush1.msra.mxu0 %v255
    %432 = vmatprep.subr.mxu0 0.0
    %433 = vmatpush1.msra.mxu0 0.0
    %434 = vmatprep.subr.mxu0 0.0
    %435 = vmatpush1.msra.mxu0 0.0
    %436 = vmatprep.subr.mxu0 0.0
    %437 = vmatpush1.msra.mxu0 0.0
    %438 = vmatprep.subr.mxu0 0.0
    %439 = vmatpush1.msra.mxu0 0.0
    %440 = vmatprep.subr.mxu0 0.0
    %441 = vmatpush1.msra.mxu0 0.0
    %442 = vmatprep.subr.mxu0 0.0
    %443 = vmatpush1.msra.mxu0 0.0
    %444 = vmatprep.subr.mxu0 0.0
    %445 = vmatpush1.msra.mxu0 0.0
    %446 = vmatprep.subr.mxu0 0.0
    %447 = vmatpush1.msra.mxu0 0.0
    %448 = vmatprep.subr.mxu0 0.0
    %449 = vmatpush1.msra.mxu0 0.0
    %450 = vmatprep.subr.mxu0 0.0
    %451 = vmatpush1.msra.mxu0 0.0
    %452 = vmatprep.subr.mxu0 0.0
    %453 = vmatpush1.msra.mxu0 0.0
    %454 = vmatprep.subr.mxu0 0.0
    %455 = vmatpush1.msra.mxu0 0.0
    %456 = vmatprep.subr.mxu0 0.0
    %457 = vmatpush1.msra.mxu0 0.0
    %458 = vmatprep.subr.mxu0 0.0
    %459 = vmatpush1.msra.mxu0 0.0
    %460 = vmatprep.subr.mxu0 0.0
    %461 = vmatpush1.msra.mxu0 0.0
    %462 = vmatprep.subr.mxu0 0.0
    %463 = vmatpush1.msra.mxu0 0.0
    %464 = vmatprep.mubr.f32.mxu0 0.0
    %465 = vmatmul.mubr.f32.gmra.mrb[0].mxu0 %v399
    %v466 = vpop.f32.mrb[0].mxu0
    %v467 = vadd.f32 0.0, %v466
    %v468 = vpop.f32.mrb[0].mxu0
    %469 = vdwg.mxu0
    %v470 = vadd.f32 %v212, %v467
    %v471 = vtanh.pop %v470
    %472 = vmatprep.subr.mxu0 0.0
    %473 = vmatpush1.msra.mxu0 %v240
    %474 = vmatprep.subr.mxu0 0.0
    %475 = vmatpush1.msra.mxu0 %v241
    %476 = vmatprep.subr.mxu0 0.0
    %477 = vmatpush1.msra.mxu0 %v242
    %478 = vmatprep.subr.mxu0 0.0
    %479 = vmatpush1.msra.mxu0 %v243
    %480 = vmatprep.subr.mxu0 0.0
    %481 = vmatpush1.msra.mxu0 %v244
    %482 = vmatprep.subr.mxu0 0.0
    %483 = vmatpush1.msra.mxu0 %v245
    %484 = vmatprep.subr.mxu0 0.0
    %485 = vmatpush1.msra.mxu0 %v246
    %486 = vmatprep.subr.mxu0 0.0
    %487 = vmatpush1.msra.mxu0 %v247
    %488 = vmatprep.subr.mxu0 0.0
    %489 = vmatpush1.msra.mxu0 %v248
    %490 = vmatprep.subr.mxu0 0.0
    %491 = vmatpush1.msra.mxu0 %v249
    %492 = vmatprep.subr.mxu0 0.0
    %493 = vmatpush1.msra.mxu0 %v250
    %494 = vmatprep.subr.mxu0 0.0
    %495 = vmatpush1.msra.mxu0 %v251
    %496 = vmatprep.subr.mxu0 0.0
    %497 = vmatpush1.msra.mxu0 %v252
    %498 = vmatprep.subr.mxu0 0.0
    %499 = vmatpush1.msra.mxu0 %v253
    %500 = vmatprep.subr.mxu0 0.0
    %501 = vmatpush1.msra.mxu0 %v254
    %502 = vmatprep.subr.mxu0 0.0
    %503 = vmatpush1.msra.mxu0 %v255
    %504 = vmatprep.subr.mxu0 0.0
    %505 = vmatpush1.msra.mxu0 0.0
    %506 = vmatprep.subr.mxu0 0.0
    %507 = vmatpush1.msra.mxu0 0.0
    %508 = vmatprep.subr.mxu0 0.0
    %509 = vmatpush1.msra.mxu0 0.0
    %510 = vmatprep.subr.mxu0 0.0
    %511 = vmatpush1.msra.mxu0 0.0
    %512 = vmatprep.subr.mxu0 0.0
    %513 = vmatpush1.msra.mxu0 0.0
    %514 = vmatprep.subr.mxu0 0.0
    %515 = vmatpush1.msra.mxu0 0.0
    %516 = vmatprep.subr.mxu0 0.0
    %517 = vmatpush1.msra.mxu0 0.0
    %518 = vmatprep.subr.mxu0 0.0
    %519 = vmatpush1.msra.mxu0 0.0
    %520 = vmatprep.subr.mxu0 0.0
    %521 = vmatpush1.msra.mxu0 0.0
    %522 = vmatprep.subr.mxu0 0.0
    %523 = vmatpush1.msra.mxu0 0.0
    %524 = vmatprep.subr.mxu0 0.0
    %525 = vmatpush1.msra.mxu0 0.0
    %526 = vmatprep.subr.mxu0 0.0
    %527 = vmatpush1.msra.mxu0 0.0
    %528 = vmatprep.subr.mxu0 0.0
    %529 = vmatpush1.msra.mxu0 0.0
    %530 = vmatprep.subr.mxu0 0.0
    %531 = vmatpush1.msra.mxu0 0.0
    %532 = vmatprep.subr.mxu0 0.0
    %533 = vmatpush1.msra.mxu0 0.0
    %534 = vmatprep.subr.mxu0 0.0
    %535 = vmatpush1.msra.mxu0 0.0
    %536 = vmatprep.mubr.f32.mxu0 0.0
    %537 = vmatmul.mubr.f32.gmra.mrb[0].mxu0 %v471
    %v538 = vpop.f32.mrb[0].mxu0
    %v539 = vadd.f32 0.0, %v538
    %v540 = vpop.f32.mrb[0].mxu0
    %541 = vdwg.mxu0
    %v542 = vadd.f32 %v217, %v539
    %v543 = vtanh.pop %v542
    %544 = vmatprep.subr.mxu0 0.0
    %545 = vmatpush1.msra.mxu0 %v240
    %546 = vmatprep.subr.mxu0 0.0
    %547 = vmatpush1.msra.mxu0 %v241
    %548 = vmatprep.subr.mxu0 0.0
    %549 = vmatpush1.msra.mxu0 %v242
    %550 = vmatprep.subr.mxu0 0.0
    %551 = vmatpush1.msra.mxu0 %v243
    %552 = vmatprep.subr.mxu0 0.0
    %553 = vmatpush1.msra.mxu0 %v244
    %554 = vmatprep.subr.mxu0 0.0
    %555 = vmatpush1.msra.mxu0 %v245
    %556 = vmatprep.subr.mxu0 0.0
    %557 = vmatpush1.msra.mxu0 %v246
    %558 = vmatprep.subr.mxu0 0.0
    %559 = vmatpush1.msra.mxu0 %v247
    %560 = vmatprep.subr.mxu0 0.0
    %561 = vmatpush1.msra.mxu0 %v248
    %562 = vmatprep.subr.mxu0 0.0
    %563 = vmatpush1.msra.mxu0 %v249
    %564 = vmatprep.subr.mxu0 0.0
    %565 = vmatpush1.msra.mxu0 %v250
    %566 = vmatprep.subr.mxu0 0.0
    %567 = vmatpush1.msra.mxu0 %v251
    %568 = vmatprep.subr.mxu0 0.0
    %569 = vmatpush1.msra.mxu0 %v252
    %570 = vmatprep.subr.mxu0 0.0
    %571 = vmatpush1.msra.mxu0 %v253
    %572 = vmatprep.subr.mxu0 0.0
    %573 = vmatpush1.msra.mxu0 %v254
    %574 = vmatprep.subr.mxu0 0.0
    %575 = vmatpush1.msra.mxu0 %v255
    %576 = vmatprep.subr.mxu0 0.0
    %577 = vmatpush1.msra.mxu0 0.0
    %578 = vmatprep.subr.mxu0 0.0
    %579 = vmatpush1.msra.mxu0 0.0
    %580 = vmatprep.subr.mxu0 0.0
    %581 = vmatpush1.msra.mxu0 0.0
    %582 = vmatprep.subr.mxu0 0.0
    %583 = vmatpush1.msra.mxu0 0.0
    %584 = vmatprep.subr.mxu0 0.0
    %585 = vmatpush1.msra.mxu0 0.0
    %586 = vmatprep.subr.mxu0 0.0
    %587 = vmatpush1.msra.mxu0 0.0
    %588 = vmatprep.subr.mxu0 0.0
    %589 = vmatpush1.msra.mxu0 0.0
    %590 = vmatprep.subr.mxu0 0.0
    %591 = vmatpush1.msra.mxu0 0.0
    %592 = vmatprep.subr.mxu0 0.0
    %593 = vmatpush1.msra.mxu0 0.0
    %594 = vmatprep.subr.mxu0 0.0
    %595 = vmatpush1.msra.mxu0 0.0
    %596 = vmatprep.subr.mxu0 0.0
    %597 = vmatpush1.msra.mxu0 0.0
    %598 = vmatprep.subr.mxu0 0.0
    %599 = vmatpush1.msra.mxu0 0.0
    %600 = vmatprep.subr.mxu0 0.0
    %601 = vmatpush1.msra.mxu0 0.0
    %602 = vmatprep.subr.mxu0 0.0
    %603 = vmatpush1.msra.mxu0 0.0
    %604 = vmatprep.subr.mxu0 0.0
    %605 = vmatpush1.msra.mxu0 0.0
    %606 = vmatprep.subr.mxu0 0.0
    %607 = vmatpush1.msra.mxu0 0.0
    %608 = vmatprep.mubr.f32.mxu0 0.0
    %609 = vmatmul.mubr.f32.gmra.mrb[0].mxu0 %v543
    %v610 = vpop.f32.mrb[0].mxu0
    %v611 = vadd.f32 0.0, %v610
    %v612 = vpop.f32.mrb[0].mxu0
    %613 = vdwg.mxu0
    %v614 = vadd.f32 %v222, %v611
    %v615 = vtanh.pop %v614
    %616 = vmatprep.subr.mxu0 0.0
    %617 = vmatpush1.msra.mxu0 %v240
    %618 = vmatprep.subr.mxu0 0.0
    %619 = vmatpush1.msra.mxu0 %v241
    %620 = vmatprep.subr.mxu0 0.0
    %621 = vmatpush1.msra.mxu0 %v242
    %622 = vmatprep.subr.mxu0 0.0
    %623 = vmatpush1.msra.mxu0 %v243
    %624 = vmatprep.subr.mxu0 0.0
    %625 = vmatpush1.msra.mxu0 %v244
    %626 = vmatprep.subr.mxu0 0.0
    %627 = vmatpush1.msra.mxu0 %v245
    %628 = vmatprep.subr.mxu0 0.0
    %629 = vmatpush1.msra.mxu0 %v246
    %630 = vmatprep.subr.mxu0 0.0
    %631 = vmatpush1.msra.mxu0 %v247
    %632 = vmatprep.subr.mxu0 0.0
    %633 = vmatpush1.msra.mxu0 %v248
    %634 = vmatprep.subr.mxu0 0.0
    %635 = vmatpush1.msra.mxu0 %v249
    %636 = vmatprep.subr.mxu0 0.0
    %637 = vmatpush1.msra.mxu0 %v250
    %638 = vmatprep.subr.mxu0 0.0
    %639 = vmatpush1.msra.mxu0 %v251
    %640 = vmatprep.subr.mxu0 0.0
    %641 = vmatpush1.msra.mxu0 %v252
    %642 = vmatprep.subr.mxu0 0.0
    %643 = vmatpush1.msra.mxu0 %v253
    %644 = vmatprep.subr.mxu0 0.0
    %645 = vmatpush1.msra.mxu0 %v254
    %646 = vmatprep.subr.mxu0 0.0
    %647 = vmatpush1.msra.mxu0 %v255
    %648 = vmatprep.subr.mxu0 0.0
    %649 = vmatpush1.msra.mxu0 0.0
    %650 = vmatprep.subr.mxu0 0.0
    %651 = vmatpush1.msra.mxu0 0.0
    %652 = vmatprep.subr.mxu0 0.0
    %653 = vmatpush1.msra.mxu0 0.0
    %654 = vmatprep.subr.mxu0 0.0
    %655 = vmatpush1.msra.mxu0 0.0
    %656 = vmatprep.subr.mxu0 0.0
    %657 = vmatpush1.msra.mxu0 0.0
    %658 = vmatprep.subr.mxu0 0.0
    %659 = vmatpush1.msra.mxu0 0.0
    %660 = vmatprep.subr.mxu0 0.0
    %661 = vmatpush1.msra.mxu0 0.0
    %662 = vmatprep.subr.mxu0 0.0
    %663 = vmatpush1.msra.mxu0 0.0
    %664 = vmatprep.subr.mxu0 0.0
    %665 = vmatpush1.msra.mxu0 0.0
    %666 = vmatprep.subr.mxu0 0.0
    %667 = vmatpush1.msra.mxu0 0.0
    %668 = vmatprep.subr.mxu0 0.0
    %669 = vmatpush1.msra.mxu0 0.0
    %670 = vmatprep.subr.mxu0 0.0
    %671 = vmatpush1.msra.mxu0 0.0
    %672 = vmatprep.subr.mxu0 0.0
    %673 = vmatpush1.msra.mxu0 0.0
    %674 = vmatprep.subr.mxu0 0.0
    %675 = vmatpush1.msra.mxu0 0.0
    %676 = vmatprep.subr.mxu0 0.0
    %677 = vmatpush1.msra.mxu0 0.0
    %678 = vmatprep.subr.mxu0 0.0
    %679 = vmatpush1.msra.mxu0 0.0
    %680 = vmatprep.mubr.f32.mxu0 0.0
    %681 = vmatmul.mubr.f32.gmra.mrb[0].mxu0 %v615
    %v682 = vpop.f32.mrb[0].mxu0
    %v683 = vadd.f32 0.0, %v682
    %v684 = vpop.f32.mrb[0].mxu0
    %685 = vdwg.mxu0
    %v686 = vadd.f32 %v227, %v683
    %v687 = vtanh.pop %v686
    %688 = vmatprep.subr.mxu0 0.0
    %689 = vmatpush1.msra.mxu0 %v240
    %690 = vmatprep.subr.mxu0 0.0
    %691 = vmatpush1.msra.mxu0 %v241
    %692 = vmatprep.subr.mxu0 0.0
    %693 = vmatpush1.msra.mxu0 %v242
    %694 = vmatprep.subr.mxu0 0.0
    %695 = vmatpush1.msra.mxu0 %v243
    %696 = vmatprep.subr.mxu0 0.0
    %697 = vmatpush1.msra.mxu0 %v244
    %698 = vmatprep.subr.mxu0 0.0
    %699 = vmatpush1.msra.mxu0 %v245
    %700 = vmatprep.subr.mxu0 0.0
    %701 = vmatpush1.msra.mxu0 %v246
    %702 = vmatprep.subr.mxu0 0.0
    %703 = vmatpush1.msra.mxu0 %v247
    %704 = vmatprep.subr.mxu0 0.0
    %705 = vmatpush1.msra.mxu0 %v248
    %706 = vmatprep.subr.mxu0 0.0
    %707 = vmatpush1.msra.mxu0 %v249
    %708 = vmatprep.subr.mxu0 0.0
    %709 = vmatpush1.msra.mxu0 %v250
    %710 = vmatprep.subr.mxu0 0.0
    %711 = vmatpush1.msra.mxu0 %v251
    %712 = vmatprep.subr.mxu0 0.0
    %713 = vmatpush1.msra.mxu0 %v252
    %714 = vmatprep.subr.mxu0 0.0
    %715 = vmatpush1.msra.mxu0 %v253
    %716 = vmatprep.subr.mxu0 0.0
    %717 = vmatpush1.msra.mxu0 %v254
    %718 = vmatprep.subr.mxu0 0.0
    %719 = vmatpush1.msra.mxu0 %v255
    %720 = vmatprep.subr.mxu0 0.0
    %721 = vmatpush1.msra.mxu0 0.0
    %722 = vmatprep.subr.mxu0 0.0
    %723 = vmatpush1.msra.mxu0 0.0
    %724 = vmatprep.subr.mxu0 0.0
    %725 = vmatpush1.msra.mxu0 0.0
    %726 = vmatprep.subr.mxu0 0.0
    %727 = vmatpush1.msra.mxu0 0.0
    %728 = vmatprep.subr.mxu0 0.0
    %729 = vmatpush1.msra.mxu0 0.0
    %730 = vmatprep.subr.mxu0 0.0
    %731 = vmatpush1.msra.mxu0 0.0
    %732 = vmatprep.subr.mxu0 0.0
    %733 = vmatpush1.msra.mxu0 0.0
    %734 = vmatprep.subr.mxu0 0.0
    %735 = vmatpush1.msra.mxu0 0.0
    %736 = vmatprep.subr.mxu0 0.0
    %737 = vmatpush1.msra.mxu0 0.0
    %738 = vmatprep.subr.mxu0 0.0
    %739 = vmatpush1.msra.mxu0 0.0
    %740 = vmatprep.subr.mxu0 0.0
    %741 = vmatpush1.msra.mxu0 0.0
    %742 = vmatprep.subr.mxu0 0.0
    %743 = vmatpush1.msra.mxu0 0.0
    %744 = vmatprep.subr.mxu0 0.0
    %745 = vmatpush1.msra.mxu0 0.0
    %746 = vmatprep.subr.mxu0 0.0
    %747 = vmatpush1.msra.mxu0 0.0
    %748 = vmatprep.subr.mxu0 0.0
    %749 = vmatpush1.msra.mxu0 0.0
    %750 = vmatprep.subr.mxu0 0.0
    %751 = vmatpush1.msra.mxu0 0.0
    %752 = vmatprep.mubr.f32.mxu0 0.0
    %753 = vmatmul.mubr.f32.gmra.mrb[0].mxu0 %v687
    %v754 = vpop.f32.mrb[0].mxu0
    %v755 = vadd.f32 0.0, %v754
    %v756 = vpop.f32.mrb[0].mxu0
    %757 = vdwg.mxu0
    %v758 = vadd.f32 %v232, %v755
    %v759 = vtanh.pop %v758
    %760 = vmatprep.subr.mxu0 0.0
    %761 = vmatpush1.msra.mxu0 %v240
    %762 = vmatprep.subr.mxu0 0.0
    %763 = vmatpush1.msra.mxu0 %v241
    %764 = vmatprep.subr.mxu0 0.0
    %765 = vmatpush1.msra.mxu0 %v242
    %766 = vmatprep.subr.mxu0 0.0
    %767 = vmatpush1.msra.mxu0 %v243
    %768 = vmatprep.subr.mxu0 0.0
    %769 = vmatpush1.msra.mxu0 %v244
    %770 = vmatprep.subr.mxu0 0.0
    %771 = vmatpush1.msra.mxu0 %v245
    %772 = vmatprep.subr.mxu0 0.0
    %773 = vmatpush1.msra.mxu0 %v246
    %774 = vmatprep.subr.mxu0 0.0
    %775 = vmatpush1.msra.mxu0 %v247
    %776 = vmatprep.subr.mxu0 0.0
    %777 = vmatpush1.msra.mxu0 %v248
    %778 = vmatprep.subr.mxu0 0.0
    %779 = vmatpush1.msra.mxu0 %v249
    %780 = vmatprep.subr.mxu0 0.0
    %781 = vmatpush1.msra.mxu0 %v250
    %782 = vmatprep.subr.mxu0 0.0
    %783 = vmatpush1.msra.mxu0 %v251
    %784 = vmatprep.subr.mxu0 0.0
    %785 = vmatpush1.msra.mxu0 %v252
    %786 = vmatprep.subr.mxu0 0.0
    %787 = vmatpush1.msra.mxu0 %v253
    %788 = vmatprep.subr.mxu0 0.0
    %789 = vmatpush1.msra.mxu0 %v254
    %790 = vmatprep.subr.mxu0 0.0
    %791 = vmatpush1.msra.mxu0 %v255
    %792 = vmatprep.subr.mxu0 0.0
    %793 = vmatpush1.msra.mxu0 0.0
    %794 = vmatprep.subr.mxu0 0.0
    %795 = vmatpush1.msra.mxu0 0.0
    %796 = vmatprep.subr.mxu0 0.0
    %797 = vmatpush1.msra.mxu0 0.0
    %798 = vmatprep.subr.mxu0 0.0
    %799 = vmatpush1.msra.mxu0 0.0
    %800 = vmatprep.subr.mxu0 0.0
    %801 = vmatpush1.msra.mxu0 0.0
    %802 = vmatprep.subr.mxu0 0.0
    %803 = vmatpush1.msra.mxu0 0.0
    %804 = vmatprep.subr.mxu0 0.0
    %805 = vmatpush1.msra.mxu0 0.0
    %806 = vmatprep.subr.mxu0 0.0
    %807 = vmatpush1.msra.mxu0 0.0
    %808 = vmatprep.subr.mxu0 0.0
    %809 = vmatpush1.msra.mxu0 0.0
    %810 = vmatprep.subr.mxu0 0.0
    %811 = vmatpush1.msra.mxu0 0.0
    %812 = vmatprep.subr.mxu0 0.0
    %813 = vmatpush1.msra.mxu0 0.0
    %814 = vmatprep.subr.mxu0 0.0
    %815 = vmatpush1.msra.mxu0 0.0
    %816 = vmatprep.subr.mxu0 0.0
    %817 = vmatpush1.msra.mxu0 0.0
    %818 = vmatprep.subr.mxu0 0.0
    %819 = vmatpush1.msra.mxu0 0.0
    %820 = vmatprep.subr.mxu0 0.0
    %821 = vmatpush1.msra.mxu0 0.0
    %822 = vmatprep.subr.mxu0 0.0
    %823 = vmatpush1.msra.mxu0 0.0
    %824 = vmatprep.mubr.f32.mxu0 0.0
    %825 = vmatmul.mubr.f32.gmra.mrb[0].mxu0 %v759
    %v826 = vpop.f32.mrb[0].mxu0
    %v827 = vadd.f32 0.0, %v826
    %v828 = vpop.f32.mrb[0].mxu0
    %829 = vdwg.mxu0
    %v830 = vadd.f32 %v237, %v827
    %v831 = vtanh.pop %v830
    %v832 = vld [vmem:[#allocation6] sm:$0xff]
    %v833 = vld [vmem:[#allocation6 + $0x8] sm:$0xff]
    %v834 = vld [vmem:[#allocation6 + $0x10] sm:$0xff]
    %v835 = vld [vmem:[#allocation6 + $0x18] sm:$0xff]
    %v836 = vld [vmem:[#allocation6 + $0x20] sm:$0xff]
    %v837 = vld [vmem:[#allocation6 + $0x28] sm:$0xff]
    %v838 = vld [vmem:[#allocation6 + $0x30] sm:$0xff]
    %v839 = vld [vmem:[#allocation6 + $0x38] sm:$0xff]
    %v840 = vld [vmem:[#allocation6 + $0x40] sm:$0xff]
    %v841 = vld [vmem:[#allocation6 + $0x48] sm:$0xff]
    %v842 = vld [vmem:[#allocation6 + $0x50] sm:$0xff]
    %v843 = vld [vmem:[#allocation6 + $0x58] sm:$0xff]
    %v844 = vld [vmem:[#allocation6 + $0x60] sm:$0xff]
    %v845 = vld [vmem:[#allocation6 + $0x68] sm:$0xff]
    %v846 = vld [vmem:[#allocation6 + $0x70] sm:$0xff]
    %v847 = vld [vmem:[#allocation6 + $0x78] sm:$0xff]
    %v848 = vld [vmem:[%s4] sm:$0x1]
    %v850 = vlaneseq
    %v851 = vshrl.u32 %v850, 7
    %v852 = vsub.s32 0, %v851
    %v853 = vrot.slane %v848, %v852
    %855 = vmatprep.subr.mxu0 0.0
    %856 = vmatpush1.msra.mxu0 %v832
    %857 = vmatprep.subr.mxu0 0.0
    %858 = vmatpush1.msra.mxu0 %v833
    %859 = vmatprep.subr.mxu0 0.0
    %860 = vmatpush1.msra.mxu0 %v834
    %861 = vmatprep.subr.mxu0 0.0
    %862 = vmatpush1.msra.mxu0 %v835
    %863 = vmatprep.subr.mxu0 0.0
    %864 = vmatpush1.msra.mxu0 %v836
    %865 = vmatprep.subr.mxu0 0.0
    %866 = vmatpush1.msra.mxu0 %v837
    %867 = vmatprep.subr.mxu0 0.0
    %868 = vmatpush1.msra.mxu0 %v838
    %869 = vmatprep.subr.mxu0 0.0
    %870 = vmatpush1.msra.mxu0 %v839
    %871 = vmatprep.subr.mxu0 0.0
    %872 = vmatpush1.msra.mxu0 %v840
    %873 = vmatprep.subr.mxu0 0.0
    %874 = vmatpush1.msra.mxu0 %v841
    %875 = vmatprep.subr.mxu0 0.0
    %876 = vmatpush1.msra.mxu0 %v842
    %877 = vmatprep.subr.mxu0 0.0
    %878 = vmatpush1.msra.mxu0 %v843
    %879 = vmatprep.subr.mxu0 0.0
    %880 = vmatpush1.msra.mxu0 %v844
    %881 = vmatprep.subr.mxu0 0.0
    %882 = vmatpush1.msra.mxu0 %v845
    %883 = vmatprep.subr.mxu0 0.0
    %884 = vmatpush1.msra.mxu0 %v846
    %885 = vmatprep.subr.mxu0 0.0
    %886 = vmatpush1.msra.mxu0 %v847
    %887 = vmatprep.subr.mxu0 0.0
    %888 = vmatpush1.msra.mxu0 0.0
    %889 = vmatprep.subr.mxu0 0.0
    %890 = vmatpush1.msra.mxu0 0.0
    %891 = vmatprep.subr.mxu0 0.0
    %892 = vmatpush1.msra.mxu0 0.0
    %893 = vmatprep.subr.mxu0 0.0
    %894 = vmatpush1.msra.mxu0 0.0
    %895 = vmatprep.subr.mxu0 0.0
    %896 = vmatpush1.msra.mxu0 0.0
    %897 = vmatprep.subr.mxu0 0.0
    %898 = vmatpush1.msra.mxu0 0.0
    %899 = vmatprep.subr.mxu0 0.0
    %900 = vmatpush1.msra.mxu0 0.0
    %901 = vmatprep.subr.mxu0 0.0
    %902 = vmatpush1.msra.mxu0 0.0
    %903 = vmatprep.subr.mxu0 0.0
    %904 = vmatpush1.msra.mxu0 0.0
    %905 = vmatprep.subr.mxu0 0.0
    %906 = vmatpush1.msra.mxu0 0.0
    %907 = vmatprep.subr.mxu0 0.0
    %908 = vmatpush1.msra.mxu0 0.0
    %909 = vmatprep.subr.mxu0 0.0
    %910 = vmatpush1.msra.mxu0 0.0
    %911 = vmatprep.subr.mxu0 0.0
    %912 = vmatpush1.msra.mxu0 0.0
    %913 = vmatprep.subr.mxu0 0.0
    %914 = vmatpush1.msra.mxu0 0.0
    %915 = vmatprep.subr.mxu0 0.0
    %916 = vmatpush1.msra.mxu0 0.0
    %917 = vmatprep.subr.mxu0 0.0
    %918 = vmatpush1.msra.mxu0 0.0
    %919 = vmatprep.mubr.f32.mxu0 0.0
    %920 = vmatmul.mubr.f32.gmra.mrb[0].mxu0 %v327
    %v921 = vpop.f32.mrb[0].mxu0
    %v922 = vadd.f32 %v853, %v921
    %v923 = vpop.f32.mrb[0].mxu0
    %924 = vmatprep.mubr.f32.mxu0 0.0
    %925 = vmatmul.mubr.f32.gmra.mrb[0].mxu0 %v399
    %v926 = vpop.f32.mrb[0].mxu0
    %v927 = vadd.f32 %v853, %v926
    %v928 = vpop.f32.mrb[0].mxu0
    %929 = vmatprep.mubr.f32.mxu0 0.0
    %930 = vmatmul.mubr.f32.gmra.mrb[0].mxu0 %v471
    %v931 = vpop.f32.mrb[0].mxu0
    %v932 = vadd.f32 %v853, %v931
    %v933 = vpop.f32.mrb[0].mxu0
    %934 = vmatprep.mubr.f32.mxu0 0.0
    %935 = vmatmul.mubr.f32.gmra.mrb[0].mxu0 %v543
    %v936 = vpop.f32.mrb[0].mxu0
    %v937 = vadd.f32 %v853, %v936
    %v938 = vpop.f32.mrb[0].mxu0
    %939 = vmatprep.mubr.f32.mxu0 0.0
    %940 = vmatmul.mubr.f32.gmra.mrb[0].mxu0 %v615
    %v941 = vpop.f32.mrb[0].mxu0
    %v942 = vadd.f32 %v853, %v941
    %v943 = vpop.f32.mrb[0].mxu0
    %944 = vmatprep.mubr.f32.mxu0 0.0
    %945 = vmatmul.mubr.f32.gmra.mrb[0].mxu0 %v687
    %v946 = vpop.f32.mrb[0].mxu0
    %v947 = vadd.f32 %v853, %v946
    %v948 = vpop.f32.mrb[0].mxu0
    %949 = vmatprep.mubr.f32.mxu0 0.0
    %950 = vmatmul.mubr.f32.gmra.mrb[0].mxu0 %v759
    %v951 = vpop.f32.mrb[0].mxu0
    %v952 = vadd.f32 %v853, %v951
    %v953 = vpop.f32.mrb[0].mxu0
    %954 = vmatprep.mubr.f32.mxu0 0.0
    %955 = vmatmul.mubr.f32.gmra.mrb[0].mxu0 %v831
    %v956 = vpop.f32.mrb[0].mxu0
    %v957 = vadd.f32 %v853, %v956
    %v958 = vpop.f32.mrb[0].mxu0
    %959 = vdwg.mxu0
    %960 = vst [vmem:[%s5] sm:$0xff] %v922
    %961 = vst [vmem:[%s5 + $0x8] sm:$0xff] %v927
    %962 = vst [vmem:[%s5 + $0x10] sm:$0xff] %v932
    %963 = vst [vmem:[%s5 + $0x18] sm:$0xff] %v937
    %964 = vst [vmem:[%s5 + $0x20] sm:$0xff] %v942
    %965 = vst [vmem:[%s5 + $0x28] sm:$0xff] %v947
    %966 = vst [vmem:[%s5 + $0x30] sm:$0xff] %v952
    %967 = vst [vmem:[%s5 + $0x38] sm:$0xff] %v957
    // Predicated region
    $region34: #{forward.1} parent=1 // pred_check
      _
    $region35: #{forward.1} parent=1 // pred_check_branch
      %969 = sbr.rel (0) target = $region37
    $region36: #{forward.1} parent=1 // pred_region
      _
    $region37: #{forward.1} parent=1 // pred_fallthru
      _
    // Predicated region
    $region38: #{forward.1} parent=1 // pred_check
      _
    $region39: #{forward.1} parent=1 // pred_check_branch
      %971 = sbr.rel (0) target = $region41
    $region40: #{forward.1} parent=1 // pred_region
      _
    $region41: #{forward.1} parent=1 // pred_fallthru
      _
    %972 = vsyncpa [#allocation3], 1
    %973 = vsyncpa [#allocation5], 1

</llo_original>
